<compile_context>
chip_gen: v7x
topology: tpu7x:2x2x1
jax: 0.10.0
libtpu: 0.0.40
codegen_flags: <defaults>
</compile_context>

<pallas_src>
import jax
import jax.numpy as jnp
from jax import lax
from jax.experimental import pallas as pl
from jax.experimental.pallas import tpu as pltpu

LANES = 128
SUBLANES = 8
CHUNK_ROWS = 512               # in-kernel chunk: bounds live temporaries to ~256 KiB
TARGET_BLOCK_BYTES = 2 << 20   # ~2 MiB per input per grid step


def _partial8(x):
    """Reduce a (size, 128) f32 chunk to an (8, 128) partial (VALU adds)."""
    size = x.shape[0]
    if size % SUBLANES == 0:
        return x.reshape(-1, SUBLANES, LANES).sum(axis=0)
    # Tiny ragged chunk (only possible when the whole problem is one small
    # block): sublane-reduce to one row and park it in row 0 of an (8,128) tile.
    row_sum = jnp.sum(x, axis=0, keepdims=True)                      # (1, 128)
    row0 = lax.broadcasted_iota(jnp.int32, (SUBLANES, LANES), 0) == 0
    return jnp.where(row0, jnp.broadcast_to(row_sum, (SUBLANES, LANES)), 0.0)


def _make_kernel(rows, block_rows, npc, ragged, chunks):
    """Build the kernel body, closing over static shape/specialization info."""

    def kernel(yp_ref, y_ref, out_ref):
        c = pl.program_id(0)   # core (parallel) axis
        i = pl.program_id(1)   # row-block (reduction) axis

        @pl.when(i == 0)
        def _():
            out_ref[...] = jnp.zeros_like(out_ref)

        def process_block(rem):
            # rem is None for fully-valid blocks (no masking emitted), or a
            # runtime scalar = number of valid rows in this block.
            acc_i = jnp.zeros((SUBLANES, LANES), jnp.float32)
            acc_s2 = jnp.zeros((SUBLANES, LANES), jnp.float32)
            for off, size in chunks:                      # static unrolled
                yp = yp_ref[pl.ds(off, size), :].astype(jnp.float32)
                y = y_ref[pl.ds(off, size), :].astype(jnp.float32)
                if rem is not None:
                    r = lax.broadcasted_iota(jnp.int32, (size, LANES), 0)
                    valid = r < (rem - off)
                    yp = jnp.where(valid, yp, 0.0)
                    y = jnp.where(valid, y, 0.0)
                prod = yp * y                              # intersection terms
                s = yp + y                                 # (p+y)^2 terms
                acc_i = acc_i + _partial8(prod)
                acc_s2 = acc_s2 + _partial8(s * s)
            out_ref[0, 0, :, :] += acc_i
            out_ref[0, 1, :, :] += acc_s2

        if not ragged:
            process_block(None)
        else:
            gb = c * npc + i                      # global (unclamped) block id
            rem = rows - gb * block_rows          # valid rows in this block

            @pl.when(rem >= block_rows)           # full block: no masking
            def _():
                process_block(None)

            @pl.when(rem < block_rows)            # ragged / phantom block
            def _():
                process_block(rem)

    return kernel


def sorensen_dice_loss(y_pred, y):
    """Pallas implementation of SorensenDiceCoefficientLoss.forward."""
    yp_flat = jnp.ravel(y_pred)   # keep original dtype; cast happens in-kernel
    y_flat = jnp.ravel(y)
    n = yp_flat.shape[0]

    # Pad only up to the 128-lane boundary (<= 127 zeros, no-op for typical
    # shapes).  Zero padding does not perturb any of the sums.
    lane_pad = (-n) % LANES
    if lane_pad:
        yp_flat = jnp.pad(yp_flat, (0, lane_pad))
        y_flat = jnp.pad(y_flat, (0, lane_pad))
    rows = (n + lane_pad) // LANES

    # ~2 MiB per input block (dtype-aware: bf16 blocks hold 2x the rows).
    itemsize = max(jnp.dtype(y_pred.dtype).itemsize, jnp.dtype(y.dtype).itemsize)
    target_rows = max(
        CHUNK_ROWS,
        (TARGET_BLOCK_BYTES // (itemsize * LANES)) // CHUNK_ROWS * CHUNK_ROWS,
    )
    block_rows = rows if rows <= target_rows else target_rows

    num_blocks = pl.cdiv(rows, block_rows)
    cores = 2 if num_blocks >= 2 else 1          # 2-TC split (v7x); harmless on 1-TC chips
    npc = pl.cdiv(num_blocks, cores)             # row-blocks per core
    ragged = (cores * npc * block_rows) != rows  # any step needs masking?

    # Static in-block chunk schedule.
    chunks = []
    off = 0
    while off < block_rows:
        size = min(CHUNK_ROWS, block_rows - off)
        chunks.append((off, size))
        off += size
    chunks = tuple(chunks)

    yp2d = yp_flat.reshape(rows, LANES)          # free reshape (contiguous)
    y2d = y_flat.reshape(rows, LANES)

    kernel = _make_kernel(rows, block_rows, npc, ragged, chunks)

    last_block = num_blocks - 1

    def in_index(c, i):
        # Clamp phantom steps (gb >= num_blocks) to the previous block so the
        # pipeline elides the redundant DMA; their contribution is fully masked.
        return (jnp.minimum(c * npc + i, last_block), 0)

    partials = pl.pallas_call(
        kernel,
        out_shape=jax.ShapeDtypeStruct((cores, 2, SUBLANES, LANES), jnp.float32),
        grid_spec=pltpu.PrefetchScalarGridSpec(
            num_scalar_prefetch=0,
            grid=(cores, npc),
            in_specs=[
                pl.BlockSpec((block_rows, LANES), in_index),
                pl.BlockSpec((block_rows, LANES), in_index),
            ],
            out_specs=pl.BlockSpec(
                (1, 2, SUBLANES, LANES), lambda c, i: (c, 0, 0, 0)
            ),
        ),
        compiler_params=pltpu.CompilerParams(
            dimension_semantics=("parallel", "arbitrary"),
        ),
    )(yp2d, y2d)

    # Tiny scalar epilogue in plain JAX.
    smooth = 1.0
    inter = jnp.sum(partials[:, 0])            # sum(p * y)
    s2 = jnp.sum(partials[:, 1])               # sum((p + y)^2)
    denom = s2 - 2.0 * inter                   # = sum(p^2) + sum(y^2)
    return 1.0 - (2.0 * inter + smooth) / (denom + smooth)


def _reference(y_pred, y):
    smooth = 1.0
    p = jnp.ravel(y_pred).astype(jnp.float32)
    t = jnp.ravel(y).astype(jnp.float32)
    return 1.0 - (2.0 * jnp.sum(p * t) + smooth) / (
        jnp.sum(p * p) + jnp.sum(t * t) + smooth
    )


if __name__ == "__main__":
    key = jax.random.PRNGKey(0)
    k1, k2 = jax.random.split(key)
    # Typical segmentation shapes: predictions in [0,1], binary targets.
    y_pred = jax.nn.sigmoid(jax.random.normal(k1, (2, 4, 16, 16), jnp.float32))
    y = (jax.random.uniform(k2, (2, 4, 16, 16)) > 0.5).astype(jnp.float32)

    loss = sorensen_dice_loss(y_pred, y)
    jax.block_until_ready(loss)

    ref = _reference(y_pred, y)
    assert jnp.allclose(loss, ref, rtol=1e-5, atol=1e-6), (loss, ref)
    print("KERNEL_OK")
</pallas_src>

<mosaic_0001>
module attributes {stable_mosaic.version = 11 : i64} {
  func.func @kernel(%arg0: i32, %arg1: i32, %arg2: memref<16x128xf32, #tpu.memory_space<vmem>>, %arg3: memref<16x128xf32, #tpu.memory_space<vmem>>, %arg4: memref<1x2x8x128xf32, #tpu.memory_space<vmem>>) attributes {dimension_semantics = [#tpu.dimension_semantics<parallel>, #tpu.dimension_semantics<arbitrary>], iteration_bounds = array<i64: 1, 1>, scalar_prefetch = 0 : i64, scratch_operands = 0 : i64, tpu.core_type = #tpu.core_type<tc>, window_params = [{transform_indices = @transform_0, window_bounds = array<i64: 16, 128>}, {transform_indices = @transform_1, window_bounds = array<i64: 16, 128>}, {transform_indices = @transform_2, window_bounds = array<i64: 1, 2, 8, 128>}]} {
    %c0_i32 = arith.constant 0 : i32
    %0 = arith.cmpi eq, %arg1, %c0_i32 : i32
    %1 = arith.extui %0 : i1 to i32
    %c0_i32_0 = arith.constant 0 : i32
    %2 = arith.cmpi ne, %1, %c0_i32_0 : i32
    scf.if %2 {
      %cst_22 = arith.constant 0.000000e+00 : f32
      %28 = vector.broadcast %cst_22 : f32 to vector<1x2x8x128xf32>
      %c0_23 = arith.constant 0 : index
      %c0_24 = arith.constant 0 : index
      %c0_25 = arith.constant 0 : index
      %c0_26 = arith.constant 0 : index
      %29 = vector.load %arg4[%c0_23, %c0_24, %c0_25, %c0_26] : memref<1x2x8x128xf32, #tpu.memory_space<vmem>>, vector<1x2x8x128xf32>
      tpu.vector_store %arg4[%c0_23, %c0_24, %c0_25, %c0_26], %28 {strides = array<i32>} : memref<1x2x8x128xf32, #tpu.memory_space<vmem>>, vector<1x2x8x128xf32>,
    } else {
    }
    %cst = arith.constant 0.000000e+00 : f32
    %3 = vector.broadcast %cst : f32 to vector<8x128xf32>
    %cst_1 = arith.constant 0.000000e+00 : f32
    %4 = vector.broadcast %cst_1 : f32 to vector<8x128xf32>
    %c0 = arith.constant 0 : index
    %c0_2 = arith.constant 0 : index
    %5 = vector.load %arg2[%c0, %c0_2] : memref<16x128xf32, #tpu.memory_space<vmem>>, vector<16x128xf32>
    %c0_3 = arith.constant 0 : index
    %c0_4 = arith.constant 0 : index
    %6 = vector.load %arg3[%c0_3, %c0_4] : memref<16x128xf32, #tpu.memory_space<vmem>>, vector<16x128xf32>
    %7 = arith.mulf %5, %6 : vector<16x128xf32>
    %8 = arith.addf %5, %6 : vector<16x128xf32>
    %9 = vector.shape_cast %7 : vector<16x128xf32> to vector<2x8x128xf32>
    %cst_5 = arith.constant dense<0.000000e+00> : vector<8x128xf32>
    %10 = vector.multi_reduction <add>, %9, %cst_5 [0] : vector<2x8x128xf32> to vector<8x128xf32>
    %11 = arith.addf %3, %10 : vector<8x128xf32>
    %12 = arith.mulf %8, %8 : vector<16x128xf32>
    %13 = vector.shape_cast %12 : vector<16x128xf32> to vector<2x8x128xf32>
    %cst_6 = arith.constant dense<0.000000e+00> : vector<8x128xf32>
    %14 = vector.multi_reduction <add>, %13, %cst_6 [0] : vector<2x8x128xf32> to vector<8x128xf32>
    %15 = arith.addf %4, %14 : vector<8x128xf32>
    %c0_7 = arith.constant 0 : index
    %c0_8 = arith.constant 0 : index
    %c0_9 = arith.constant 0 : index
    %c0_10 = arith.constant 0 : index
    %16 = vector.load %arg4[%c0_7, %c0_8, %c0_9, %c0_10] : memref<1x2x8x128xf32, #tpu.memory_space<vmem>>, vector<1x1x8x128xf32>
    %17 = vector.shape_cast %16 : vector<1x1x8x128xf32> to vector<8x128xf32>
    %18 = arith.addf %17, %11 : vector<8x128xf32>
    %c0_11 = arith.constant 0 : index
    %c0_12 = arith.constant 0 : index
    %c0_13 = arith.constant 0 : index
    %c0_14 = arith.constant 0 : index
    %19 = vector.load %arg4[%c0_11, %c0_12, %c0_13, %c0_14] : memref<1x2x8x128xf32, #tpu.memory_space<vmem>>, vector<1x1x8x128xf32>
    %20 = vector.shape_cast %19 : vector<1x1x8x128xf32> to vector<8x128xf32>
    %21 = vector.shape_cast %18 : vector<8x128xf32> to vector<1x1x8x128xf32>
    tpu.vector_store %arg4[%c0_11, %c0_12, %c0_13, %c0_14], %21 {strides = array<i32>} : memref<1x2x8x128xf32, #tpu.memory_space<vmem>>, vector<1x1x8x128xf32>,
    %c0_15 = arith.constant 0 : index
    %c1 = arith.constant 1 : index
    %c0_16 = arith.constant 0 : index
    %c0_17 = arith.constant 0 : index
    %22 = vector.load %arg4[%c0_15, %c1, %c0_16, %c0_17] : memref<1x2x8x128xf32, #tpu.memory_space<vmem>>, vector<1x1x8x128xf32>
    %23 = vector.shape_cast %22 : vector<1x1x8x128xf32> to vector<8x128xf32>
    %24 = arith.addf %23, %15 : vector<8x128xf32>
    %c0_18 = arith.constant 0 : index
    %c1_19 = arith.constant 1 : index
    %c0_20 = arith.constant 0 : index
    %c0_21 = arith.constant 0 : index
    %25 = vector.load %arg4[%c0_18, %c1_19, %c0_20, %c0_21] : memref<1x2x8x128xf32, #tpu.memory_space<vmem>>, vector<1x1x8x128xf32>
    %26 = vector.shape_cast %25 : vector<1x1x8x128xf32> to vector<8x128xf32>
    %27 = vector.shape_cast %24 : vector<8x128xf32> to vector<1x1x8x128xf32>
    tpu.vector_store %arg4[%c0_18, %c1_19, %c0_20, %c0_21], %27 {strides = array<i32>} : memref<1x2x8x128xf32, #tpu.memory_space<vmem>>, vector<1x1x8x128xf32>,
    return
  }
  func.func @transform_0(%arg0: i32, %arg1: i32) -> (i32, i32) {
    %c1_i32 = arith.constant 1 : i32
    %0 = arith.muli %arg0, %c1_i32 : i32
    %1 = arith.addi %0, %arg1 : i32
    %c0_i32 = arith.constant 0 : i32
    %2 = arith.minsi %1, %c0_i32 : i32
    %c0_i32_0 = arith.constant 0 : i32
    %c0_i32_1 = arith.constant 0 : i32
    return %2, %c0_i32_0 : i32, i32
  }
  func.func @transform_1(%arg0: i32, %arg1: i32) -> (i32, i32) {
    %c1_i32 = arith.constant 1 : i32
    %0 = arith.muli %arg0, %c1_i32 : i32
    %1 = arith.addi %0, %arg1 : i32
    %c0_i32 = arith.constant 0 : i32
    %2 = arith.minsi %1, %c0_i32 : i32
    %c0_i32_0 = arith.constant 0 : i32
    %c0_i32_1 = arith.constant 0 : i32
    return %2, %c0_i32_0 : i32, i32
  }
  func.func @transform_2(%arg0: i32, %arg1: i32) -> (i32, i32, i32, i32) {
    %c0_i32 = arith.constant 0 : i32
    %c0_i32_0 = arith.constant 0 : i32
    %c0_i32_1 = arith.constant 0 : i32
    %c0_i32_2 = arith.constant 0 : i32
    return %arg0, %c0_i32, %c0_i32_0, %c0_i32_1 : i32, i32, i32, i32
  }
}

</mosaic_0001>

<llo_original>
// kernel: tpu_custom_call.1
$region0: #{tpu_custom_call.1}
  #allocation0 [shape = 'u32[]', space=smem, size = 0x4, offset = 0x4, fixed_abs, tag = 'smem constant byte address 0x4 - core index']
  #allocation1 [shape = 'u32[144,128]{1,0:T(1,128)}', space=vmem, size = 0x12000, scoped, tag = 'internal scratch']
  %s0 = inlined_call_operand.hbm [shape: f32[16,128], index: 0, kind: input, shape index: {}]
  %s1 = inlined_call_operand.hbm [shape: f32[16,128], index: 1, kind: input, shape index: {}]
  %s2 = inlined_call_operand.hbm [shape: f32[1,2,8,128], index: 2, kind: output, shape index: {}]
  %s3 = sld [smem:[#allocation0]]
  $region30: #{tpu_custom_call.1} parent=0
    _
  %s5 = ssub.s32 1, %s3
  %s6 = scalar_select 0, %s5, %s3
  $region1: #{tpu_custom_call.1} parent=0
    #allocation2 [shape = 'u8[8192]{0}', space=vmem, size = 0x2000, scoped, tag = 'input window, operand 0, single buffered']
    #allocation3 [shape = 's32[1]{0}', space=sflag, size = 0x4, scoped, tag = 'scoped memory for tpu_custom_call.1']
    #allocation4 [shape = 's32[1]{0}', space=sflag, size = 0x4, scoped, tag = 'scoped memory for tpu_custom_call.1']
    #allocation5 [shape = 'u8[8192]{0}', space=vmem, size = 0x2000, scoped, tag = 'input window, operand 1, single buffered']
    #allocation6 [shape = 's32[1]{0}', space=sflag, size = 0x4, scoped, tag = 'scoped memory for tpu_custom_call.1']
    #allocation7 [shape = 'u8[8192]{0}', space=vmem, size = 0x2000, scoped, tag = 'output window, operand 0, single buffered']
    %7 = vsyncpa [#allocation3], 0
    %8 = vsyncpa [#allocation6], 0
    %9 = vsyncpa [#allocation4], 0
    // Predicated region
    $region2: #{tpu_custom_call.1} parent=1 // pred_check
      _
    $region3: #{tpu_custom_call.1} parent=1 // pred_check_branch
      %11 = sbr.rel (0) target = $region5
    $region4: #{tpu_custom_call.1} parent=1 // pred_region
      %s12 = sadd.s32 0, 0
      %p13 = scmp.lt.s32.totalorder %s12, 0
      %s14 = scalar_select %p13, %s12, 0
      %s15 = smul.u32 2, %s14
      %s17 = ssub.s32 256, 256
      %18 = vsyncadd [#allocation3], %s17
      %s19 = smul.addr %s15, 128
      %s20 = scalar_lea.hbm %s0, %s19
      %s21 = sshll.u32 [#allocation2], 4
      %s22 = int_to_ptr.vmem [resolvable:$true] %s21
      %27 = dma.hbm_to_vmem [thread:$0]  %s20, 256, %s22, [#allocation3], 128, 128, 8
    $region5: #{tpu_custom_call.1} parent=1 // pred_fallthru
      _
    // Predicated region
    $region6: #{tpu_custom_call.1} parent=1 // pred_check
      _
    $region7: #{tpu_custom_call.1} parent=1 // pred_check_branch
      %29 = sbr.rel (0) target = $region9
    $region8: #{tpu_custom_call.1} parent=1 // pred_region
      %s30 = sadd.s32 0, 0
      %p31 = scmp.lt.s32.totalorder %s30, 0
      %s32 = scalar_select %p31, %s30, 0
      %s33 = smul.u32 2, %s32
      %s35 = ssub.s32 256, 256
      %36 = vsyncadd [#allocation6], %s35
      %s37 = smul.addr %s33, 128
      %s38 = scalar_lea.hbm %s1, %s37
      %s39 = sshll.u32 [#allocation5], 4
      %s40 = int_to_ptr.vmem [resolvable:$true] %s39
      %45 = dma.hbm_to_vmem [thread:$0]  %s38, 256, %s40, [#allocation6], 128, 128, 8
    $region9: #{tpu_custom_call.1} parent=1 // pred_fallthru
      _
    // Predicated region
    $region10: #{tpu_custom_call.1} parent=1 // pred_check
      _
    $region11: #{tpu_custom_call.1} parent=1 // pred_check_branch
      %47 = sbr.rel (0) target = $region13
    $region12: #{tpu_custom_call.1} parent=1 // pred_region
      %48 = dma.done [#allocation3], 256
    $region13: #{tpu_custom_call.1} parent=1 // pred_fallthru
      _
    // Predicated region
    $region14: #{tpu_custom_call.1} parent=1 // pred_check
      _
    $region15: #{tpu_custom_call.1} parent=1 // pred_check_branch
      %50 = sbr.rel (0) target = $region17
    $region16: #{tpu_custom_call.1} parent=1 // pred_region
      %51 = dma.done [#allocation6], 256
    $region17: #{tpu_custom_call.1} parent=1 // pred_fallthru
      _
    %s52 = sadd.s32 0, 0
    %p53 = scmp.lt.s32.totalorder %s52, 0
    %s54 = scalar_select %p53, %s52, 0
    %s55 = smul.u32 2, %s54
    %s56 = sadd.s32 0, 0
    %p57 = scmp.lt.s32.totalorder %s56, 0
    %s58 = scalar_select %p57, %s56, 0
    %s59 = smul.u32 2, %s58
    %p60 = scmp.eq.s32.totalorder 0, 0
    // Predicated region
    $region18: #{tpu_custom_call.1} parent=1 // pred_check
      %p61 = pneg %p60
    $region19: #{tpu_custom_call.1} parent=1 // pred_check_branch
      %63 = sbr.rel (%p61) target = $region21
    $region20: #{tpu_custom_call.1} parent=1 // pred_region
      %64 = vst [vmem:[#allocation7] sm:$0xff] 0.0
      %65 = vst [vmem:[#allocation7 + $0x8] sm:$0xff] 0.0
    $region21: #{tpu_custom_call.1} parent=1 // pred_fallthru
      _
    %v66 = vld [vmem:[#allocation2] sm:$0xff]
    %v67 = vld [vmem:[#allocation2 + $0x8] sm:$0xff]
    %v68 = vld [vmem:[#allocation5] sm:$0xff]
    %v69 = vld [vmem:[#allocation5 + $0x8] sm:$0xff]
    %v70 = vmul.f32 %v66, %v68
    %v71 = vmul.f32 %v67, %v69
    %v72 = vadd.f32 %v66, %v68
    %v73 = vadd.f32 %v67, %v69
    %v74 = vadd.f32 %v70, %v71
    %v75 = vadd.f32 %v74, 0.0
    %v76 = vmul.f32 %v72, %v72
    %v77 = vmul.f32 %v73, %v73
    %v78 = vadd.f32 %v76, %v77
    %v79 = vadd.f32 %v78, 0.0
    %v80 = vld [vmem:[#allocation7] sm:$0xff]
    %v81 = vadd.f32 %v80, %v75
    %82 = vst [vmem:[#allocation7] sm:$0xff] %v81
    %s83 = scalar_lea.vmem [#allocation7], 8
    %v84 = vld [vmem:[%s83] sm:$0xff]
    %v85 = vadd.f32 %v84, %v79
    %86 = vst [vmem:[%s83] sm:$0xff] %v85
    // Predicated region
    $region22: #{tpu_custom_call.1} parent=1 // pred_check
      _
    $region23: #{tpu_custom_call.1} parent=1 // pred_check_branch
      %88 = sbr.rel (0) target = $region25
    $region24: #{tpu_custom_call.1} parent=1 // pred_region
      %s90 = ssub.s32 256, 256
      %91 = vsyncadd [#allocation4], %s90
      %s92 = sshll.u32 [#allocation7], 4
      %s93 = int_to_ptr.vmem [resolvable:$true] %s92
      %98 = dma.vmem_to_hbm [thread:$0]  %s93, 256, %s2, [#allocation4], 128, 128, 8
    $region25: #{tpu_custom_call.1} parent=1 // pred_fallthru
      _
    // Predicated region
    $region26: #{tpu_custom_call.1} parent=1 // pred_check
      _
    $region27: #{tpu_custom_call.1} parent=1 // pred_check_branch
      %100 = sbr.rel (0) target = $region29
    $region28: #{tpu_custom_call.1} parent=1 // pred_region
      %101 = dma.done [#allocation4], 256
    $region29: #{tpu_custom_call.1} parent=1 // pred_fallthru
      _
    %102 = vsyncpa [#allocation3], 1
    %103 = vsyncpa [#allocation6], 1
    %104 = vsyncpa [#allocation4], 1

</llo_original>
